<compile_context>
chip_gen: v7x
topology: tpu7x:2x2x1
jax: 0.10.0
libtpu: 0.0.40
codegen_flags: <defaults>
</compile_context>

<pallas_src>
import numpy as np
import jax
import jax.numpy as jnp
from jax.experimental import pallas as pl
from jax.experimental.pallas import tpu as pltpu

BN_EPS = 1e-5


# ---------------------------------------------------------------------------
# Fused kernel, identity branch (in_filters == out_filters):
#   out = relu( bn2(conv2( relu(bn2(conv1(x))) )) + x )
# ---------------------------------------------------------------------------
def _resblock_identity_kernel(xp_ref, w1_ref, s1_ref, w2_ref, s2_ref,
                              o_ref, y1p_scr):
    # xp_ref:  (N, L + 2*pad, C)   zero-padded input (NLC)
    # w*_ref:  (K, C, C)           BN-folded conv weights, tap-major
    # s*_ref:  (1, C)              folded conv-bias + BN shift
    # o_ref:   (N, L, C)
    # y1p_scr: (N, L + 2*pad, C)   padded intermediate activation (VMEM)
    N, L, C = o_ref.shape
    K = w1_ref.shape[0]
    pad = K // 2

    # conv1 + bn2 + relu  (stride 1, 'same'); K static -> unrolled tap dots.
    acc1 = jnp.zeros((N * L, C), jnp.float32)
    for k in range(K):
        tap = xp_ref[:, k:k + L, :].reshape(N * L, C)
        acc1 = acc1 + jnp.dot(tap, w1_ref[k], preferred_element_type=jnp.float32)
    y1 = jnp.maximum(acc1 + s1_ref[...], 0.0)

    # conv2 + bn2 (stride 1, 'same'); halo via padded scratch, zero halo only.
    if pad > 0:
        y1p_scr[:, :pad, :] = jnp.zeros((N, pad, C), jnp.float32)
        y1p_scr[:, pad + L:, :] = jnp.zeros((N, pad, C), jnp.float32)
    y1p_scr[:, pad:pad + L, :] = y1.reshape(N, L, C)
    acc2 = jnp.zeros((N * L, C), jnp.float32)
    for k in range(K):
        tap = y1p_scr[:, k:k + L, :].reshape(N * L, C)
        acc2 = acc2 + jnp.dot(tap, w2_ref[k], preferred_element_type=jnp.float32)
    y2 = acc2 + s2_ref[...]

    # residual add + relu (in-register)
    x_res = xp_ref[:, pad:pad + L, :].reshape(N * L, C)
    o_ref[...] = jnp.maximum(y2 + x_res, 0.0).reshape(N, L, C)


# ---------------------------------------------------------------------------
# Fused kernel, projection branch (in_filters != out_filters):
#   out = relu( bn2(conv2( relu(bn2(conv1_s2(x))) )) + bn2(conv3_s2(x)) )
# conv1 and conv3 (both stride 2 on x) share ONE wrapper-built im2col matrix,
# so each is a single MXU dot with contraction depth K*Cin.
# ---------------------------------------------------------------------------
def _resblock_projection_kernel(xc_ref, w1_ref, s1_ref, w2_ref, s2_ref,
                                w3_ref, s3_ref, o_ref, y1p_scr):
    # xc_ref:  (N, L2, K*Cin)      stride-2 im2col of padded x (NLC)
    # w1/w3:   (K*Cin, Cout)       BN-folded stride-2 conv weights (im2col form)
    # w2:      (K, Cout, Cout)     BN-folded stride-1 conv weight, tap-major
    # s*_ref:  (1, Cout)
    # o_ref:   (N, L2, Cout)
    # y1p_scr: (N, L2 + 2*pad, Cout)
    N, L2, Cout = o_ref.shape
    KCin = xc_ref.shape[2]
    K = w2_ref.shape[0]
    pad = K // 2

    # conv1 (stride 2) + bn2 + relu  and  conv3 (stride 2) + bn2: one dot each
    # over the shared im2col tap matrix.
    xc = xc_ref[...].reshape(N * L2, KCin)
    y1 = jnp.maximum(
        jnp.dot(xc, w1_ref[...], preferred_element_type=jnp.float32) + s1_ref[...],
        0.0)
    y3 = jnp.dot(xc, w3_ref[...], preferred_element_type=jnp.float32) + s3_ref[...]

    # conv2 (stride 1, 'same') + bn2 on y1; halo via scratch, zero halo only.
    if pad > 0:
        y1p_scr[:, :pad, :] = jnp.zeros((N, pad, Cout), jnp.float32)
        y1p_scr[:, pad + L2:, :] = jnp.zeros((N, pad, Cout), jnp.float32)
    y1p_scr[:, pad:pad + L2, :] = y1.reshape(N, L2, Cout)
    acc2 = jnp.zeros((N * L2, Cout), jnp.float32)
    for k in range(K):
        tap = y1p_scr[:, k:k + L2, :].reshape(N * L2, Cout)
        acc2 = acc2 + jnp.dot(tap, w2_ref[k], preferred_element_type=jnp.float32)
    y2 = acc2 + s2_ref[...]

    o_ref[...] = jnp.maximum(y2 + y3, 0.0).reshape(N, L2, Cout)


# ---------------------------------------------------------------------------
# Host-side folding / wrapper
# ---------------------------------------------------------------------------
def _fold_bn(w_oik, b, gamma, beta, mean, var):
    """Fold eval-mode BN into a tap-major weight (K, Cin, Cout) + shift (1, Cout)."""
    scale = gamma / jnp.sqrt(var + BN_EPS)                       # (Cout,)
    w_kio = jnp.transpose(w_oik, (2, 1, 0)) * scale[None, None, :]
    shift = (b - mean) * scale + beta
    return w_kio, shift[None, :]


def resnet_block_forward(x_ncl, params):
    """Forward of ResNetBlock. x_ncl: (N, C_in, L) in PyTorch layout."""
    # TODO(synk): BatchNorm1d is implemented in eval mode with the provided
    # running stats; train-mode batch statistics are not reproduced.
    in_f = params["in_filters"]
    out_f = params["out_filters"]
    K = params["kernel_size"]
    pad = K // 2

    gamma, beta = params["bn2_gamma"], params["bn2_beta"]
    mean, var = params["bn2_mean"], params["bn2_var"]
    w1, s1 = _fold_bn(params["conv1_w"], params["conv1_b"], gamma, beta, mean, var)
    w2, s2 = _fold_bn(params["conv2_w"], params["conv2_b"], gamma, beta, mean, var)

    x = jnp.transpose(x_ncl, (0, 2, 1)).astype(jnp.float32)      # NCL -> NLC
    N, L, _ = x.shape
    xp = jnp.pad(x, ((0, 0), (pad, pad), (0, 0)))                # pad once

    if in_f == out_f:
        out_nlc = pl.pallas_call(
            _resblock_identity_kernel,
            out_shape=jax.ShapeDtypeStruct((N, L, out_f), jnp.float32),
            scratch_shapes=[pltpu.VMEM((N, L + 2 * pad, out_f), jnp.float32)],
        )(xp, w1, s1, w2, s2)
    else:
        w3, s3 = _fold_bn(params["conv3_w"], params["conv3_b"],
                          gamma, beta, mean, var)
        L2 = (L + 2 * pad - K) // 2 + 1
        # Wrapper-side stride-2 im2col (layout plumbing only):
        #   xcol[n, i, k, :] = xp[n, 2*i + k, :]  -> (N, L2, K*Cin)
        xcol = jnp.stack([xp[:, k::2, :][:, :L2, :] for k in range(K)], axis=2)
        xcol = xcol.reshape(N, L2, K * in_f)
        w1c = w1.reshape(K * in_f, out_f)                        # (K*Cin, Cout)
        w3c = w3.reshape(K * in_f, out_f)
        out_nlc = pl.pallas_call(
            _resblock_projection_kernel,
            out_shape=jax.ShapeDtypeStruct((N, L2, out_f), jnp.float32),
            scratch_shapes=[pltpu.VMEM((N, L2 + 2 * pad, out_f), jnp.float32)],
        )(xcol, w1c, s1, w2, s2, w3c, s3)

    return jnp.transpose(out_nlc, (0, 2, 1))                     # NLC -> NCL


# ---------------------------------------------------------------------------
# Deterministic synthetic parameters
# ---------------------------------------------------------------------------
def init_block_params(key, in_filters, out_filters, kernel_size=3):
    keys = jax.random.split(key, 10)

    def conv_init(kw, kb, cin, cout):
        w = jax.random.normal(kw, (cout, cin, kernel_size),
                              jnp.float32) / np.sqrt(cin * kernel_size)
        b = 0.1 * jax.random.normal(kb, (cout,), jnp.float32)
        return w, b

    p = {"in_filters": in_filters, "out_filters": out_filters,
         "kernel_size": kernel_size}
    p["conv1_w"], p["conv1_b"] = conv_init(keys[0], keys[1], in_filters, out_filters)
    p["conv2_w"], p["conv2_b"] = conv_init(keys[2], keys[3], out_filters, out_filters)
    if in_filters != out_filters:
        p["conv3_w"], p["conv3_b"] = conv_init(keys[4], keys[5],
                                               in_filters, out_filters)
    p["bn2_gamma"] = 1.0 + 0.1 * jax.random.normal(keys[6], (out_filters,), jnp.float32)
    p["bn2_beta"] = 0.1 * jax.random.normal(keys[7], (out_filters,), jnp.float32)
    p["bn2_mean"] = 0.1 * jax.random.normal(keys[8], (out_filters,), jnp.float32)
    p["bn2_var"] = jnp.abs(jax.random.normal(keys[9], (out_filters,), jnp.float32)) + 0.5
    return p


# ---------------------------------------------------------------------------
# Pure-JAX reference (NCL, PyTorch semantics) for validation
# ---------------------------------------------------------------------------
def _conv1d_ref(x_ncl, w, b, stride, pad):
    N, Cin, L = x_ncl.shape
    Cout, _, K = w.shape
    xp = jnp.pad(x_ncl, ((0, 0), (0, 0), (pad, pad)))
    L_out = (L + 2 * pad - K) // stride + 1
    y = jnp.zeros((N, Cout, L_out), jnp.float32)
    for k in range(K):
        xk = xp[:, :, k::stride][:, :, :L_out]
        y = y + jnp.einsum("ncl,oc->nol", xk, w[:, :, k])
    return y + b[None, :, None]


def _bn_eval_ref(y, gamma, beta, mean, var):
    return (y - mean[None, :, None]) / jnp.sqrt(var[None, :, None] + BN_EPS) \
        * gamma[None, :, None] + beta[None, :, None]


def reference_forward(x_ncl, params):
    in_f, out_f, K = params["in_filters"], params["out_filters"], params["kernel_size"]
    pad = K // 2
    bn = lambda y: _bn_eval_ref(y, params["bn2_gamma"], params["bn2_beta"],
                                params["bn2_mean"], params["bn2_var"])
    if in_f == out_f:
        r = jnp.maximum(bn(_conv1d_ref(x_ncl, params["conv1_w"], params["conv1_b"], 1, pad)), 0.0)
        r = bn(_conv1d_ref(r, params["conv2_w"], params["conv2_b"], 1, pad))
        return jnp.maximum(r + x_ncl, 0.0)
    else:
        r = jnp.maximum(bn(_conv1d_ref(x_ncl, params["conv1_w"], params["conv1_b"], 2, pad)), 0.0)
        r = bn(_conv1d_ref(r, params["conv2_w"], params["conv2_b"], 1, pad))
        sc = bn(_conv1d_ref(x_ncl, params["conv3_w"], params["conv3_b"], 2, pad))
        return jnp.maximum(r + sc, 0.0)


if __name__ == "__main__":
    key = jax.random.PRNGKey(0)
    k_x1, k_x2, k_p1, k_p2 = jax.random.split(key, 4)

    # Case 1: in_filters == out_filters (identity shortcut), x: (2, 8, 16) NCL
    N, C, L = 2, 8, 16
    x1 = jax.random.normal(k_x1, (N, C, L), jnp.float32)
    p1 = init_block_params(k_p1, C, C, 3)
    out1 = jax.block_until_ready(resnet_block_forward(x1, p1))
    np.testing.assert_allclose(np.asarray(out1),
                               np.asarray(reference_forward(x1, p1)),
                               rtol=1e-4, atol=1e-4)

    # Case 2: in_filters != out_filters (stride-2 projection), x: (2, 4, 16)
    Cin, Cout = 4, 8
    x2 = jax.random.normal(k_x2, (N, Cin, L), jnp.float32)
    p2 = init_block_params(k_p2, Cin, Cout, 3)
    out2 = jax.block_until_ready(resnet_block_forward(x2, p2))
    assert out2.shape == (N, Cout, (L + 2 * 1 - 3) // 2 + 1)
    np.testing.assert_allclose(np.asarray(out2),
                               np.asarray(reference_forward(x2, p2)),
                               rtol=1e-4, atol=1e-4)

    print("KERNEL_OK")
</pallas_src>

<mosaic_0001>
module attributes {stable_mosaic.version = 11 : i64} {
  func.func @_resblock_identity_kernel(%arg0: memref<2x18x8xf32, #tpu.memory_space<vmem>>, %arg1: memref<3x8x8xf32, #tpu.memory_space<vmem>>, %arg2: memref<1x8xf32, #tpu.memory_space<vmem>>, %arg3: memref<3x8x8xf32, #tpu.memory_space<vmem>>, %arg4: memref<1x8xf32, #tpu.memory_space<vmem>>, %arg5: memref<2x16x8xf32, #tpu.memory_space<vmem>>, %arg6: memref<2x18x8xf32, #tpu.memory_space<vmem>>) attributes {dimension_semantics = [], scalar_prefetch = 0 : i64, scratch_operands = 1 : i64, tpu.core_type = #tpu.core_type<tc>} {
    %cst = arith.constant 0.000000e+00 : f32
    %0 = vector.broadcast %cst : f32 to vector<32x8xf32>
    %c0 = arith.constant 0 : index
    %c0_0 = arith.constant 0 : index
    %c0_1 = arith.constant 0 : index
    %1 = vector.load %arg0[%c0, %c0_0, %c0_1] : memref<2x18x8xf32, #tpu.memory_space<vmem>>, vector<2x16x8xf32>
    %2 = vector.shape_cast %1 : vector<2x16x8xf32> to vector<32x8xf32>
    %c0_2 = arith.constant 0 : index
    %c0_3 = arith.constant 0 : index
    %c0_4 = arith.constant 0 : index
    %3 = vector.load %arg1[%c0_2, %c0_3, %c0_4] : memref<3x8x8xf32, #tpu.memory_space<vmem>>, vector<1x8x8xf32>
    %4 = vector.shape_cast %3 : vector<1x8x8xf32> to vector<8x8xf32>
    %cst_5 = arith.constant dense<0.000000e+00> : vector<32x8xf32>
    %5 = tpu.matmul %2, %4, %cst_5 {dimension_numbers = #tpu.dot_dimension_numbers<[1], [0], [0], [1], [0, 0, 1, 1], [], []>} : vector<32x8xf32>, vector<8x8xf32>, vector<32x8xf32> -> vector<32x8xf32>
    %6 = arith.addf %0, %5 : vector<32x8xf32>
    %c0_6 = arith.constant 0 : index
    %c1 = arith.constant 1 : index
    %c0_7 = arith.constant 0 : index
    %7 = vector.load %arg0[%c0_6, %c1, %c0_7] : memref<2x18x8xf32, #tpu.memory_space<vmem>>, vector<2x16x8xf32>
    %8 = vector.shape_cast %7 : vector<2x16x8xf32> to vector<32x8xf32>
    %c1_8 = arith.constant 1 : index
    %c0_9 = arith.constant 0 : index
    %c0_10 = arith.constant 0 : index
    %9 = vector.load %arg1[%c1_8, %c0_9, %c0_10] : memref<3x8x8xf32, #tpu.memory_space<vmem>>, vector<1x8x8xf32>
    %10 = vector.shape_cast %9 : vector<1x8x8xf32> to vector<8x8xf32>
    %cst_11 = arith.constant dense<0.000000e+00> : vector<32x8xf32>
    %11 = tpu.matmul %8, %10, %cst_11 {dimension_numbers = #tpu.dot_dimension_numbers<[1], [0], [0], [1], [0, 0, 1, 1], [], []>} : vector<32x8xf32>, vector<8x8xf32>, vector<32x8xf32> -> vector<32x8xf32>
    %12 = arith.addf %6, %11 : vector<32x8xf32>
    %c0_12 = arith.constant 0 : index
    %c2 = arith.constant 2 : index
    %c0_13 = arith.constant 0 : index
    %13 = vector.load %arg0[%c0_12, %c2, %c0_13] : memref<2x18x8xf32, #tpu.memory_space<vmem>>, vector<2x16x8xf32>
    %14 = vector.shape_cast %13 : vector<2x16x8xf32> to vector<32x8xf32>
    %c2_14 = arith.constant 2 : index
    %c0_15 = arith.constant 0 : index
    %c0_16 = arith.constant 0 : index
    %15 = vector.load %arg1[%c2_14, %c0_15, %c0_16] : memref<3x8x8xf32, #tpu.memory_space<vmem>>, vector<1x8x8xf32>
    %16 = vector.shape_cast %15 : vector<1x8x8xf32> to vector<8x8xf32>
    %cst_17 = arith.constant dense<0.000000e+00> : vector<32x8xf32>
    %17 = tpu.matmul %14, %16, %cst_17 {dimension_numbers = #tpu.dot_dimension_numbers<[1], [0], [0], [1], [0, 0, 1, 1], [], []>} : vector<32x8xf32>, vector<8x8xf32>, vector<32x8xf32> -> vector<32x8xf32>
    %18 = arith.addf %12, %17 : vector<32x8xf32>
    %c0_18 = arith.constant 0 : index
    %c0_19 = arith.constant 0 : index
    %19 = vector.load %arg2[%c0_18, %c0_19] : memref<1x8xf32, #tpu.memory_space<vmem>>, vector<1x8xf32>
    %20 = vector.broadcast %19 : vector<1x8xf32> to vector<32x8xf32>
    %21 = arith.addf %18, %20 : vector<32x8xf32>
    %cst_20 = arith.constant 0.000000e+00 : f32
    %22 = vector.broadcast %cst_20 : f32 to vector<32x8xf32>
    %23 = arith.maximumf %21, %22 : vector<32x8xf32>
    %cst_21 = arith.constant 0.000000e+00 : f32
    %24 = vector.broadcast %cst_21 : f32 to vector<2x1x8xf32>
    %c0_22 = arith.constant 0 : index
    %c0_23 = arith.constant 0 : index
    %c0_24 = arith.constant 0 : index
    %25 = vector.load %arg6[%c0_22, %c0_23, %c0_24] : memref<2x18x8xf32, #tpu.memory_space<vmem>>, vector<2x1x8xf32>
    tpu.vector_store %arg6[%c0_22, %c0_23, %c0_24], %24 {strides = array<i32>} : memref<2x18x8xf32, #tpu.memory_space<vmem>>, vector<2x1x8xf32>,
    %cst_25 = arith.constant 0.000000e+00 : f32
    %26 = vector.broadcast %cst_25 : f32 to vector<2x1x8xf32>
    %c0_26 = arith.constant 0 : index
    %c17 = arith.constant 17 : index
    %c0_27 = arith.constant 0 : index
    %27 = vector.load %arg6[%c0_26, %c17, %c0_27] : memref<2x18x8xf32, #tpu.memory_space<vmem>>, vector<2x1x8xf32>
    tpu.vector_store %arg6[%c0_26, %c17, %c0_27], %26 {strides = array<i32>} : memref<2x18x8xf32, #tpu.memory_space<vmem>>, vector<2x1x8xf32>,
    %28 = vector.shape_cast %23 : vector<32x8xf32> to vector<2x16x8xf32>
    %c0_28 = arith.constant 0 : index
    %c1_29 = arith.constant 1 : index
    %c0_30 = arith.constant 0 : index
    %29 = vector.load %arg6[%c0_28, %c1_29, %c0_30] : memref<2x18x8xf32, #tpu.memory_space<vmem>>, vector<2x16x8xf32>
    tpu.vector_store %arg6[%c0_28, %c1_29, %c0_30], %28 {strides = array<i32>} : memref<2x18x8xf32, #tpu.memory_space<vmem>>, vector<2x16x8xf32>,
    %cst_31 = arith.constant 0.000000e+00 : f32
    %30 = vector.broadcast %cst_31 : f32 to vector<32x8xf32>
    %c0_32 = arith.constant 0 : index
    %c0_33 = arith.constant 0 : index
    %c0_34 = arith.constant 0 : index
    %31 = vector.load %arg6[%c0_32, %c0_33, %c0_34] : memref<2x18x8xf32, #tpu.memory_space<vmem>>, vector<2x16x8xf32>
    %32 = vector.shape_cast %31 : vector<2x16x8xf32> to vector<32x8xf32>
    %c0_35 = arith.constant 0 : index
    %c0_36 = arith.constant 0 : index
    %c0_37 = arith.constant 0 : index
    %33 = vector.load %arg3[%c0_35, %c0_36, %c0_37] : memref<3x8x8xf32, #tpu.memory_space<vmem>>, vector<1x8x8xf32>
    %34 = vector.shape_cast %33 : vector<1x8x8xf32> to vector<8x8xf32>
    %cst_38 = arith.constant dense<0.000000e+00> : vector<32x8xf32>
    %35 = tpu.matmul %32, %34, %cst_38 {dimension_numbers = #tpu.dot_dimension_numbers<[1], [0], [0], [1], [0, 0, 1, 1], [], []>} : vector<32x8xf32>, vector<8x8xf32>, vector<32x8xf32> -> vector<32x8xf32>
    %36 = arith.addf %30, %35 : vector<32x8xf32>
    %c0_39 = arith.constant 0 : index
    %c1_40 = arith.constant 1 : index
    %c0_41 = arith.constant 0 : index
    %37 = vector.load %arg6[%c0_39, %c1_40, %c0_41] : memref<2x18x8xf32, #tpu.memory_space<vmem>>, vector<2x16x8xf32>
    %38 = vector.shape_cast %37 : vector<2x16x8xf32> to vector<32x8xf32>
    %c1_42 = arith.constant 1 : index
    %c0_43 = arith.constant 0 : index
    %c0_44 = arith.constant 0 : index
    %39 = vector.load %arg3[%c1_42, %c0_43, %c0_44] : memref<3x8x8xf32, #tpu.memory_space<vmem>>, vector<1x8x8xf32>
    %40 = vector.shape_cast %39 : vector<1x8x8xf32> to vector<8x8xf32>
    %cst_45 = arith.constant dense<0.000000e+00> : vector<32x8xf32>
    %41 = tpu.matmul %38, %40, %cst_45 {dimension_numbers = #tpu.dot_dimension_numbers<[1], [0], [0], [1], [0, 0, 1, 1], [], []>} : vector<32x8xf32>, vector<8x8xf32>, vector<32x8xf32> -> vector<32x8xf32>
    %42 = arith.addf %36, %41 : vector<32x8xf32>
    %c0_46 = arith.constant 0 : index
    %c2_47 = arith.constant 2 : index
    %c0_48 = arith.constant 0 : index
    %43 = vector.load %arg6[%c0_46, %c2_47, %c0_48] : memref<2x18x8xf32, #tpu.memory_space<vmem>>, vector<2x16x8xf32>
    %44 = vector.shape_cast %43 : vector<2x16x8xf32> to vector<32x8xf32>
    %c2_49 = arith.constant 2 : index
    %c0_50 = arith.constant 0 : index
    %c0_51 = arith.constant 0 : index
    %45 = vector.load %arg3[%c2_49, %c0_50, %c0_51] : memref<3x8x8xf32, #tpu.memory_space<vmem>>, vector<1x8x8xf32>
    %46 = vector.shape_cast %45 : vector<1x8x8xf32> to vector<8x8xf32>
    %cst_52 = arith.constant dense<0.000000e+00> : vector<32x8xf32>
    %47 = tpu.matmul %44, %46, %cst_52 {dimension_numbers = #tpu.dot_dimension_numbers<[1], [0], [0], [1], [0, 0, 1, 1], [], []>} : vector<32x8xf32>, vector<8x8xf32>, vector<32x8xf32> -> vector<32x8xf32>
    %48 = arith.addf %42, %47 : vector<32x8xf32>
    %c0_53 = arith.constant 0 : index
    %c0_54 = arith.constant 0 : index
    %49 = vector.load %arg4[%c0_53, %c0_54] : memref<1x8xf32, #tpu.memory_space<vmem>>, vector<1x8xf32>
    %50 = vector.broadcast %49 : vector<1x8xf32> to vector<32x8xf32>
    %51 = arith.addf %48, %50 : vector<32x8xf32>
    %c0_55 = arith.constant 0 : index
    %c1_56 = arith.constant 1 : index
    %c0_57 = arith.constant 0 : index
    %52 = vector.load %arg0[%c0_55, %c1_56, %c0_57] : memref<2x18x8xf32, #tpu.memory_space<vmem>>, vector<2x16x8xf32>
    %53 = vector.shape_cast %52 : vector<2x16x8xf32> to vector<32x8xf32>
    %54 = arith.addf %51, %53 : vector<32x8xf32>
    %cst_58 = arith.constant 0.000000e+00 : f32
    %55 = vector.broadcast %cst_58 : f32 to vector<32x8xf32>
    %56 = arith.maximumf %54, %55 : vector<32x8xf32>
    %57 = vector.shape_cast %56 : vector<32x8xf32> to vector<2x16x8xf32>
    %c0_59 = arith.constant 0 : index
    %c0_60 = arith.constant 0 : index
    %c0_61 = arith.constant 0 : index
    %58 = vector.load %arg5[%c0_59, %c0_60, %c0_61] : memref<2x16x8xf32, #tpu.memory_space<vmem>>, vector<2x16x8xf32>
    tpu.vector_store %arg5[%c0_59, %c0_60, %c0_61], %57 {strides = array<i32>} : memref<2x16x8xf32, #tpu.memory_space<vmem>>, vector<2x16x8xf32>,
    return
  }
}

</mosaic_0001>

<llo_original>
// kernel: tpu_custom_call.1
$region0: #{tpu_custom_call.1}
  #allocation0 [shape = 'u32[]', space=smem, size = 0x4, offset = 0x4, fixed_abs, tag = 'smem constant byte address 0x4 - core index']
  #allocation1 [shape = 'u32[144,128]{1,0:T(1,128)}', space=vmem, size = 0x12000, scoped, tag = 'internal scratch']
  #allocation2 [shape = 'f32[2,18,8]{2,1,0:T(8,128)}', space=vmem, size = 0x6000, scoped, tag = 'scratch operand']
  %s0 = inlined_call_operand.vmem [shape: f32[2,18,8], index: 0, kind: input, shape index: {}]
  %s1 = inlined_call_operand.vmem [shape: f32[3,8,8], index: 1, kind: input, shape index: {}]
  %s2 = inlined_call_operand.vmem [shape: f32[1,8], index: 2, kind: input, shape index: {}]
  %s3 = inlined_call_operand.vmem [shape: f32[3,8,8], index: 3, kind: input, shape index: {}]
  %s4 = inlined_call_operand.vmem [shape: f32[1,8], index: 4, kind: input, shape index: {}]
  %s5 = inlined_call_operand.vmem [shape: f32[2,16,8], index: 5, kind: output, shape index: {}]
  %s6 = sld [smem:[#allocation0]]
  $region30: #{tpu_custom_call.1} parent=0
    _
  %s8 = ssub.s32 1, %s6
  %s9 = scalar_select 0, %s8, %s6
  // Predicated region
  $region2: #{tpu_custom_call.1} parent=0 // pred_check
    _
  $region3: #{tpu_custom_call.1} parent=0 // pred_check_branch
    %11 = sbr.rel (0) target = $region5
  $region4: #{tpu_custom_call.1} parent=0 // pred_region
    _
  $region5: #{tpu_custom_call.1} parent=0 // pred_fallthru
    _
  // Predicated region
  $region6: #{tpu_custom_call.1} parent=0 // pred_check
    _
  $region7: #{tpu_custom_call.1} parent=0 // pred_check_branch
    %13 = sbr.rel (0) target = $region9
  $region8: #{tpu_custom_call.1} parent=0 // pred_region
    _
  $region9: #{tpu_custom_call.1} parent=0 // pred_fallthru
    _
  // Predicated region
  $region10: #{tpu_custom_call.1} parent=0 // pred_check
    _
  $region11: #{tpu_custom_call.1} parent=0 // pred_check_branch
    %15 = sbr.rel (0) target = $region13
  $region12: #{tpu_custom_call.1} parent=0 // pred_region
    _
  $region13: #{tpu_custom_call.1} parent=0 // pred_fallthru
    _
  // Predicated region
  $region14: #{tpu_custom_call.1} parent=0 // pred_check
    _
  $region15: #{tpu_custom_call.1} parent=0 // pred_check_branch
    %17 = sbr.rel (0) target = $region17
  $region16: #{tpu_custom_call.1} parent=0 // pred_region
    _
  $region17: #{tpu_custom_call.1} parent=0 // pred_fallthru
    _
  // Predicated region
  $region18: #{tpu_custom_call.1} parent=0 // pred_check
    _
  $region19: #{tpu_custom_call.1} parent=0 // pred_check_branch
    %19 = sbr.rel (0) target = $region21
  $region20: #{tpu_custom_call.1} parent=0 // pred_region
    _
  $region21: #{tpu_custom_call.1} parent=0 // pred_fallthru
    _
  %v20 = vld [vmem:[%s0] sm:$0xff]
  %v21 = vld [vmem:[%s0 + $0x8] sm:$0xff]
  %v22 = vld [vmem:[%s0 + $0x18] sm:$0xff]
  %v23 = vld [vmem:[%s0 + $0x20] sm:$0xff]
  %v24 = vld [vmem:[%s1] sm:$0xff]
  %v25 = vld [vmem:[%s0 + $0x1] sm:$0xff]
  %v26 = vld [vmem:[%s0 + $0x9] sm:$0xff]
  %v27 = vld [vmem:[%s0 + $0x19] sm:$0xff]
  %v28 = vld [vmem:[%s0 + $0x21] sm:$0xff]
  %s29 = scalar_lea.vmem %s1, 8
  %v30 = vld [vmem:[%s29] sm:$0xff]
  %vm31 = vcmask 64512
  %v33 = vsel %vm31, %v25, 0
  %v36 = vsel %vm31, %v26, 0
  %v39 = vsel %vm31, %v27, 0
  %v42 = vsel %vm31, %v28, 0
  %44 = vmatprep.subr.mxu0 0.0
  %45 = vmatpush1.msra.mxu0 %v30
  %46 = vmatprep.subr.mxu0 0.0
  %47 = vmatpush1.msra.mxu0 0.0
  %48 = vmatprep.subr.mxu0 0.0
  %49 = vmatpush1.msra.mxu0 0.0
  %50 = vmatprep.subr.mxu0 0.0
  %51 = vmatpush1.msra.mxu0 0.0
  %52 = vmatprep.subr.mxu0 0.0
  %53 = vmatpush1.msra.mxu0 0.0
  %54 = vmatprep.subr.mxu0 0.0
  %55 = vmatpush1.msra.mxu0 0.0
  %56 = vmatprep.subr.mxu0 0.0
  %57 = vmatpush1.msra.mxu0 0.0
  %58 = vmatprep.subr.mxu0 0.0
  %59 = vmatpush1.msra.mxu0 0.0
  %60 = vmatprep.subr.mxu0 0.0
  %61 = vmatpush1.msra.mxu0 0.0
  %62 = vmatprep.subr.mxu0 0.0
  %63 = vmatpush1.msra.mxu0 0.0
  %64 = vmatprep.subr.mxu0 0.0
  %65 = vmatpush1.msra.mxu0 0.0
  %66 = vmatprep.subr.mxu0 0.0
  %67 = vmatpush1.msra.mxu0 0.0
  %68 = vmatprep.subr.mxu0 0.0
  %69 = vmatpush1.msra.mxu0 0.0
  %70 = vmatprep.subr.mxu0 0.0
  %71 = vmatpush1.msra.mxu0 0.0
  %72 = vmatprep.subr.mxu0 0.0
  %73 = vmatpush1.msra.mxu0 0.0
  %74 = vmatprep.subr.mxu0 0.0
  %75 = vmatpush1.msra.mxu0 0.0
  %76 = vmatprep.subr.mxu0 0.0
  %77 = vmatpush1.msra.mxu0 0.0
  %78 = vmatprep.subr.mxu0 0.0
  %79 = vmatpush1.msra.mxu0 0.0
  %80 = vmatprep.subr.mxu0 0.0
  %81 = vmatpush1.msra.mxu0 0.0
  %82 = vmatprep.subr.mxu0 0.0
  %83 = vmatpush1.msra.mxu0 0.0
  %84 = vmatprep.subr.mxu0 0.0
  %85 = vmatpush1.msra.mxu0 0.0
  %86 = vmatprep.subr.mxu0 0.0
  %87 = vmatpush1.msra.mxu0 0.0
  %88 = vmatprep.subr.mxu0 0.0
  %89 = vmatpush1.msra.mxu0 0.0
  %90 = vmatprep.subr.mxu0 0.0
  %91 = vmatpush1.msra.mxu0 0.0
  %92 = vmatprep.subr.mxu0 0.0
  %93 = vmatpush1.msra.mxu0 0.0
  %94 = vmatprep.subr.mxu0 0.0
  %95 = vmatpush1.msra.mxu0 0.0
  %96 = vmatprep.subr.mxu0 0.0
  %97 = vmatpush1.msra.mxu0 0.0
  %98 = vmatprep.subr.mxu0 0.0
  %99 = vmatpush1.msra.mxu0 0.0
  %100 = vmatprep.subr.mxu0 0.0
  %101 = vmatpush1.msra.mxu0 0.0
  %102 = vmatprep.subr.mxu0 0.0
  %103 = vmatpush1.msra.mxu0 0.0
  %104 = vmatprep.subr.mxu0 0.0
  %105 = vmatpush1.msra.mxu0 0.0
  %106 = vmatprep.subr.mxu0 0.0
  %107 = vmatpush1.msra.mxu0 0.0
  %108 = vmatprep.mubr.f32.mxu0 0.0
  %109 = vmatmul.mubr.f32.gmra.mrb[0].mxu0 %v33
  %v110 = vpop.f32.mrb[0].mxu0
  %v111 = vadd.f32 0.0, %v110
  %v112 = vpop.f32.mrb[0].mxu0
  %113 = vmatprep.mubr.f32.mxu0 0.0
  %114 = vmatmul.mubr.f32.gmra.mrb[0].mxu0 %v36
  %v115 = vpop.f32.mrb[0].mxu0
  %v116 = vadd.f32 0.0, %v115
  %v117 = vpop.f32.mrb[0].mxu0
  %118 = vmatprep.mubr.f32.mxu0 0.0
  %119 = vmatmul.mubr.f32.gmra.mrb[0].mxu0 %v39
  %v120 = vpop.f32.mrb[0].mxu0
  %v121 = vadd.f32 0.0, %v120
  %v122 = vpop.f32.mrb[0].mxu0
  %123 = vmatprep.mubr.f32.mxu0 0.0
  %124 = vmatmul.mubr.f32.gmra.mrb[0].mxu0 %v42
  %v125 = vpop.f32.mrb[0].mxu0
  %v126 = vadd.f32 0.0, %v125
  %v127 = vpop.f32.mrb[0].mxu0
  %128 = vdwg.mxu0
  %v130 = vsel %vm31, %v20, 0
  %v133 = vsel %vm31, %v21, 0
  %v136 = vsel %vm31, %v22, 0
  %v139 = vsel %vm31, %v23, 0
  %141 = vmatprep.subr.mxu0 0.0
  %142 = vmatpush1.msra.mxu0 %v24
  %143 = vmatprep.subr.mxu0 0.0
  %144 = vmatpush1.msra.mxu0 0.0
  %145 = vmatprep.subr.mxu0 0.0
  %146 = vmatpush1.msra.mxu0 0.0
  %147 = vmatprep.subr.mxu0 0.0
  %148 = vmatpush1.msra.mxu0 0.0
  %149 = vmatprep.subr.mxu0 0.0
  %150 = vmatpush1.msra.mxu0 0.0
  %151 = vmatprep.subr.mxu0 0.0
  %152 = vmatpush1.msra.mxu0 0.0
  %153 = vmatprep.subr.mxu0 0.0
  %154 = vmatpush1.msra.mxu0 0.0
  %155 = vmatprep.subr.mxu0 0.0
  %156 = vmatpush1.msra.mxu0 0.0
  %157 = vmatprep.subr.mxu0 0.0
  %158 = vmatpush1.msra.mxu0 0.0
  %159 = vmatprep.subr.mxu0 0.0
  %160 = vmatpush1.msra.mxu0 0.0
  %161 = vmatprep.subr.mxu0 0.0
  %162 = vmatpush1.msra.mxu0 0.0
  %163 = vmatprep.subr.mxu0 0.0
  %164 = vmatpush1.msra.mxu0 0.0
  %165 = vmatprep.subr.mxu0 0.0
  %166 = vmatpush1.msra.mxu0 0.0
  %167 = vmatprep.subr.mxu0 0.0
  %168 = vmatpush1.msra.mxu0 0.0
  %169 = vmatprep.subr.mxu0 0.0
  %170 = vmatpush1.msra.mxu0 0.0
  %171 = vmatprep.subr.mxu0 0.0
  %172 = vmatpush1.msra.mxu0 0.0
  %173 = vmatprep.subr.mxu0 0.0
  %174 = vmatpush1.msra.mxu0 0.0
  %175 = vmatprep.subr.mxu0 0.0
  %176 = vmatpush1.msra.mxu0 0.0
  %177 = vmatprep.subr.mxu0 0.0
  %178 = vmatpush1.msra.mxu0 0.0
  %179 = vmatprep.subr.mxu0 0.0
  %180 = vmatpush1.msra.mxu0 0.0
  %181 = vmatprep.subr.mxu0 0.0
  %182 = vmatpush1.msra.mxu0 0.0
  %183 = vmatprep.subr.mxu0 0.0
  %184 = vmatpush1.msra.mxu0 0.0
  %185 = vmatprep.subr.mxu0 0.0
  %186 = vmatpush1.msra.mxu0 0.0
  %187 = vmatprep.subr.mxu0 0.0
  %188 = vmatpush1.msra.mxu0 0.0
  %189 = vmatprep.subr.mxu0 0.0
  %190 = vmatpush1.msra.mxu0 0.0
  %191 = vmatprep.subr.mxu0 0.0
  %192 = vmatpush1.msra.mxu0 0.0
  %193 = vmatprep.subr.mxu0 0.0
  %194 = vmatpush1.msra.mxu0 0.0
  %195 = vmatprep.subr.mxu0 0.0
  %196 = vmatpush1.msra.mxu0 0.0
  %197 = vmatprep.subr.mxu0 0.0
  %198 = vmatpush1.msra.mxu0 0.0
  %199 = vmatprep.subr.mxu0 0.0
  %200 = vmatpush1.msra.mxu0 0.0
  %201 = vmatprep.subr.mxu0 0.0
  %202 = vmatpush1.msra.mxu0 0.0
  %203 = vmatprep.subr.mxu0 0.0
  %204 = vmatpush1.msra.mxu0 0.0
  %205 = vmatprep.mubr.f32.mxu0 0.0
  %206 = vmatmul.mubr.f32.gmra.mrb[0].mxu0 %v130
  %v207 = vpop.f32.mrb[0].mxu0
  %v208 = vadd.f32 %v111, %v207
  %v209 = vpop.f32.mrb[0].mxu0
  %210 = vmatprep.mubr.f32.mxu0 0.0
  %211 = vmatmul.mubr.f32.gmra.mrb[0].mxu0 %v133
  %v212 = vpop.f32.mrb[0].mxu0
  %v213 = vadd.f32 %v116, %v212
  %v214 = vpop.f32.mrb[0].mxu0
  %215 = vmatprep.mubr.f32.mxu0 0.0
  %216 = vmatmul.mubr.f32.gmra.mrb[0].mxu0 %v136
  %v217 = vpop.f32.mrb[0].mxu0
  %v218 = vadd.f32 %v121, %v217
  %v219 = vpop.f32.mrb[0].mxu0
  %220 = vmatprep.mubr.f32.mxu0 0.0
  %221 = vmatmul.mubr.f32.gmra.mrb[0].mxu0 %v139
  %v222 = vpop.f32.mrb[0].mxu0
  %v223 = vadd.f32 %v126, %v222
  %v224 = vpop.f32.mrb[0].mxu0
  %225 = vdwg.mxu0
  %v226 = vld [vmem:[%s0 + $0x2] sm:$0xff]
  %v227 = vld [vmem:[%s0 + $0xa] sm:$0xff]
  %v228 = vld [vmem:[%s0 + $0x1a] sm:$0xff]
  %v229 = vld [vmem:[%s0 + $0x22] sm:$0xff]
  %s230 = scalar_lea.vmem %s1, 16
  %v231 = vld [vmem:[%s230] sm:$0xff]
  %v233 = vsel %vm31, %v226, 0
  %v236 = vsel %vm31, %v227, 0
  %v239 = vsel %vm31, %v228, 0
  %v242 = vsel %vm31, %v229, 0
  %244 = vmatprep.subr.mxu0 0.0
  %245 = vmatpush1.msra.mxu0 %v231
  %246 = vmatprep.subr.mxu0 0.0
  %247 = vmatpush1.msra.mxu0 0.0
  %248 = vmatprep.subr.mxu0 0.0
  %249 = vmatpush1.msra.mxu0 0.0
  %250 = vmatprep.subr.mxu0 0.0
  %251 = vmatpush1.msra.mxu0 0.0
  %252 = vmatprep.subr.mxu0 0.0
  %253 = vmatpush1.msra.mxu0 0.0
  %254 = vmatprep.subr.mxu0 0.0
  %255 = vmatpush1.msra.mxu0 0.0
  %256 = vmatprep.subr.mxu0 0.0
  %257 = vmatpush1.msra.mxu0 0.0
  %258 = vmatprep.subr.mxu0 0.0
  %259 = vmatpush1.msra.mxu0 0.0
  %260 = vmatprep.subr.mxu0 0.0
  %261 = vmatpush1.msra.mxu0 0.0
  %262 = vmatprep.subr.mxu0 0.0
  %263 = vmatpush1.msra.mxu0 0.0
  %264 = vmatprep.subr.mxu0 0.0
  %265 = vmatpush1.msra.mxu0 0.0
  %266 = vmatprep.subr.mxu0 0.0
  %267 = vmatpush1.msra.mxu0 0.0
  %268 = vmatprep.subr.mxu0 0.0
  %269 = vmatpush1.msra.mxu0 0.0
  %270 = vmatprep.subr.mxu0 0.0
  %271 = vmatpush1.msra.mxu0 0.0
  %272 = vmatprep.subr.mxu0 0.0
  %273 = vmatpush1.msra.mxu0 0.0
  %274 = vmatprep.subr.mxu0 0.0
  %275 = vmatpush1.msra.mxu0 0.0
  %276 = vmatprep.subr.mxu0 0.0
  %277 = vmatpush1.msra.mxu0 0.0
  %278 = vmatprep.subr.mxu0 0.0
  %279 = vmatpush1.msra.mxu0 0.0
  %280 = vmatprep.subr.mxu0 0.0
  %281 = vmatpush1.msra.mxu0 0.0
  %282 = vmatprep.subr.mxu0 0.0
  %283 = vmatpush1.msra.mxu0 0.0
  %284 = vmatprep.subr.mxu0 0.0
  %285 = vmatpush1.msra.mxu0 0.0
  %286 = vmatprep.subr.mxu0 0.0
  %287 = vmatpush1.msra.mxu0 0.0
  %288 = vmatprep.subr.mxu0 0.0
  %289 = vmatpush1.msra.mxu0 0.0
  %290 = vmatprep.subr.mxu0 0.0
  %291 = vmatpush1.msra.mxu0 0.0
  %292 = vmatprep.subr.mxu0 0.0
  %293 = vmatpush1.msra.mxu0 0.0
  %294 = vmatprep.subr.mxu0 0.0
  %295 = vmatpush1.msra.mxu0 0.0
  %296 = vmatprep.subr.mxu0 0.0
  %297 = vmatpush1.msra.mxu0 0.0
  %298 = vmatprep.subr.mxu0 0.0
  %299 = vmatpush1.msra.mxu0 0.0
  %300 = vmatprep.subr.mxu0 0.0
  %301 = vmatpush1.msra.mxu0 0.0
  %302 = vmatprep.subr.mxu0 0.0
  %303 = vmatpush1.msra.mxu0 0.0
  %304 = vmatprep.subr.mxu0 0.0
  %305 = vmatpush1.msra.mxu0 0.0
  %306 = vmatprep.subr.mxu0 0.0
  %307 = vmatpush1.msra.mxu0 0.0
  %308 = vmatprep.mubr.f32.mxu0 0.0
  %309 = vmatmul.mubr.f32.gmra.mrb[0].mxu0 %v233
  %v310 = vpop.f32.mrb[0].mxu0
  %v311 = vadd.f32 0.0, %v310
  %v312 = vpop.f32.mrb[0].mxu0
  %313 = vmatprep.mubr.f32.mxu0 0.0
  %314 = vmatmul.mubr.f32.gmra.mrb[0].mxu0 %v236
  %v315 = vpop.f32.mrb[0].mxu0
  %v316 = vadd.f32 0.0, %v315
  %v317 = vpop.f32.mrb[0].mxu0
  %318 = vmatprep.mubr.f32.mxu0 0.0
  %319 = vmatmul.mubr.f32.gmra.mrb[0].mxu0 %v239
  %v320 = vpop.f32.mrb[0].mxu0
  %v321 = vadd.f32 0.0, %v320
  %v322 = vpop.f32.mrb[0].mxu0
  %323 = vmatprep.mubr.f32.mxu0 0.0
  %324 = vmatmul.mubr.f32.gmra.mrb[0].mxu0 %v242
  %v325 = vpop.f32.mrb[0].mxu0
  %v326 = vadd.f32 0.0, %v325
  %v327 = vpop.f32.mrb[0].mxu0
  %328 = vdwg.mxu0
  %v329 = vadd.f32 %v208, %v311
  %v330 = vadd.f32 %v213, %v316
  %v331 = vadd.f32 %v218, %v321
  %v332 = vadd.f32 %v223, %v326
  %v333 = vld [vmem:[%s2] sm:$0x1]
  %v335 = vlaneseq
  %v336 = vshrl.u32 %v335, 7
  %v337 = vsub.s32 0, %v336
  %v338 = vrot.slane %v333, %v337
  %v340 = vadd.f32 %v329, %v338
  %v341 = vadd.f32 %v330, %v338
  %v342 = vadd.f32 %v331, %v338
  %v343 = vadd.f32 %v332, %v338
  %v344 = vmax.f32 %v340, 0.0
  %v345 = vmax.f32 %v341, 0.0
  %v346 = vmax.f32 %v342, 0.0
  %v347 = vmax.f32 %v343, 0.0
  %vm348 = vcmask 57344
  %349 = vst.msk [vmem:[#allocation2] sm:$0x1] %vm348, 0.0
  %350 = vst.msk [vmem:[#allocation2 + $0x18] sm:$0x1] %vm348, 0.0
  %351 = vst.msk [vmem:[#allocation2 + $0x11] sm:$0x1] %vm348, 0.0
  %352 = vst.msk [vmem:[#allocation2 + $0x29] sm:$0x1] %vm348, 0.0
  %353 = vst.msk [vmem:[#allocation2 + $0x1] sm:$0xff] %vm31, %v344
  %354 = vst.msk [vmem:[#allocation2 + $0x9] sm:$0xff] %vm31, %v345
  %355 = vst.msk [vmem:[#allocation2 + $0x19] sm:$0xff] %vm31, %v346
  %356 = vst.msk [vmem:[#allocation2 + $0x21] sm:$0xff] %vm31, %v347
  %v357 = vld [vmem:[#allocation2] sm:$0xff]
  %v358 = vld [vmem:[#allocation2 + $0x8] sm:$0xff]
  %v359 = vld [vmem:[#allocation2 + $0x18] sm:$0xff]
  %v360 = vld [vmem:[#allocation2 + $0x20] sm:$0xff]
  %v361 = vld [vmem:[%s3] sm:$0xff]
  %v362 = vld [vmem:[#allocation2 + $0x1] sm:$0xff]
  %v363 = vld [vmem:[#allocation2 + $0x9] sm:$0xff]
  %v364 = vld [vmem:[#allocation2 + $0x19] sm:$0xff]
  %v365 = vld [vmem:[#allocation2 + $0x21] sm:$0xff]
  %s366 = scalar_lea.vmem %s3, 8
  %v367 = vld [vmem:[%s366] sm:$0xff]
  %v369 = vsel %vm31, %v362, 0
  %v372 = vsel %vm31, %v363, 0
  %v375 = vsel %vm31, %v364, 0
  %v378 = vsel %vm31, %v365, 0
  %380 = vmatprep.subr.mxu0 0.0
  %381 = vmatpush1.msra.mxu0 %v367
  %382 = vmatprep.subr.mxu0 0.0
  %383 = vmatpush1.msra.mxu0 0.0
  %384 = vmatprep.subr.mxu0 0.0
  %385 = vmatpush1.msra.mxu0 0.0
  %386 = vmatprep.subr.mxu0 0.0
  %387 = vmatpush1.msra.mxu0 0.0
  %388 = vmatprep.subr.mxu0 0.0
  %389 = vmatpush1.msra.mxu0 0.0
  %390 = vmatprep.subr.mxu0 0.0
  %391 = vmatpush1.msra.mxu0 0.0
  %392 = vmatprep.subr.mxu0 0.0
  %393 = vmatpush1.msra.mxu0 0.0
  %394 = vmatprep.subr.mxu0 0.0
  %395 = vmatpush1.msra.mxu0 0.0
  %396 = vmatprep.subr.mxu0 0.0
  %397 = vmatpush1.msra.mxu0 0.0
  %398 = vmatprep.subr.mxu0 0.0
  %399 = vmatpush1.msra.mxu0 0.0
  %400 = vmatprep.subr.mxu0 0.0
  %401 = vmatpush1.msra.mxu0 0.0
  %402 = vmatprep.subr.mxu0 0.0
  %403 = vmatpush1.msra.mxu0 0.0
  %404 = vmatprep.subr.mxu0 0.0
  %405 = vmatpush1.msra.mxu0 0.0
  %406 = vmatprep.subr.mxu0 0.0
  %407 = vmatpush1.msra.mxu0 0.0
  %408 = vmatprep.subr.mxu0 0.0
  %409 = vmatpush1.msra.mxu0 0.0
  %410 = vmatprep.subr.mxu0 0.0
  %411 = vmatpush1.msra.mxu0 0.0
  %412 = vmatprep.subr.mxu0 0.0
  %413 = vmatpush1.msra.mxu0 0.0
  %414 = vmatprep.subr.mxu0 0.0
  %415 = vmatpush1.msra.mxu0 0.0
  %416 = vmatprep.subr.mxu0 0.0
  %417 = vmatpush1.msra.mxu0 0.0
  %418 = vmatprep.subr.mxu0 0.0
  %419 = vmatpush1.msra.mxu0 0.0
  %420 = vmatprep.subr.mxu0 0.0
  %421 = vmatpush1.msra.mxu0 0.0
  %422 = vmatprep.subr.mxu0 0.0
  %423 = vmatpush1.msra.mxu0 0.0
  %424 = vmatprep.subr.mxu0 0.0
  %425 = vmatpush1.msra.mxu0 0.0
  %426 = vmatprep.subr.mxu0 0.0
  %427 = vmatpush1.msra.mxu0 0.0
  %428 = vmatprep.subr.mxu0 0.0
  %429 = vmatpush1.msra.mxu0 0.0
  %430 = vmatprep.subr.mxu0 0.0
  %431 = vmatpush1.msra.mxu0 0.0
  %432 = vmatprep.subr.mxu0 0.0
  %433 = vmatpush1.msra.mxu0 0.0
  %434 = vmatprep.subr.mxu0 0.0
  %435 = vmatpush1.msra.mxu0 0.0
  %436 = vmatprep.subr.mxu0 0.0
  %437 = vmatpush1.msra.mxu0 0.0
  %438 = vmatprep.subr.mxu0 0.0
  %439 = vmatpush1.msra.mxu0 0.0
  %440 = vmatprep.subr.mxu0 0.0
  %441 = vmatpush1.msra.mxu0 0.0
  %442 = vmatprep.subr.mxu0 0.0
  %443 = vmatpush1.msra.mxu0 0.0
  %444 = vmatprep.mubr.f32.mxu0 0.0
  %445 = vmatmul.mubr.f32.gmra.mrb[0].mxu0 %v369
  %v446 = vpop.f32.mrb[0].mxu0
  %v447 = vadd.f32 0.0, %v446
  %v448 = vpop.f32.mrb[0].mxu0
  %449 = vmatprep.mubr.f32.mxu0 0.0
  %450 = vmatmul.mubr.f32.gmra.mrb[0].mxu0 %v372
  %v451 = vpop.f32.mrb[0].mxu0
  %v452 = vadd.f32 0.0, %v451
  %v453 = vpop.f32.mrb[0].mxu0
  %454 = vmatprep.mubr.f32.mxu0 0.0
  %455 = vmatmul.mubr.f32.gmra.mrb[0].mxu0 %v375
  %v456 = vpop.f32.mrb[0].mxu0
  %v457 = vadd.f32 0.0, %v456
  %v458 = vpop.f32.mrb[0].mxu0
  %459 = vmatprep.mubr.f32.mxu0 0.0
  %460 = vmatmul.mubr.f32.gmra.mrb[0].mxu0 %v378
  %v461 = vpop.f32.mrb[0].mxu0
  %v462 = vadd.f32 0.0, %v461
  %v463 = vpop.f32.mrb[0].mxu0
  %464 = vdwg.mxu0
  %v466 = vsel %vm31, %v357, 0
  %v469 = vsel %vm31, %v358, 0
  %v472 = vsel %vm31, %v359, 0
  %v475 = vsel %vm31, %v360, 0
  %477 = vmatprep.subr.mxu0 0.0
  %478 = vmatpush1.msra.mxu0 %v361
  %479 = vmatprep.subr.mxu0 0.0
  %480 = vmatpush1.msra.mxu0 0.0
  %481 = vmatprep.subr.mxu0 0.0
  %482 = vmatpush1.msra.mxu0 0.0
  %483 = vmatprep.subr.mxu0 0.0
  %484 = vmatpush1.msra.mxu0 0.0
  %485 = vmatprep.subr.mxu0 0.0
  %486 = vmatpush1.msra.mxu0 0.0
  %487 = vmatprep.subr.mxu0 0.0
  %488 = vmatpush1.msra.mxu0 0.0
  %489 = vmatprep.subr.mxu0 0.0
  %490 = vmatpush1.msra.mxu0 0.0
  %491 = vmatprep.subr.mxu0 0.0
  %492 = vmatpush1.msra.mxu0 0.0
  %493 = vmatprep.subr.mxu0 0.0
  %494 = vmatpush1.msra.mxu0 0.0
  %495 = vmatprep.subr.mxu0 0.0
  %496 = vmatpush1.msra.mxu0 0.0
  %497 = vmatprep.subr.mxu0 0.0
  %498 = vmatpush1.msra.mxu0 0.0
  %499 = vmatprep.subr.mxu0 0.0
  %500 = vmatpush1.msra.mxu0 0.0
  %501 = vmatprep.subr.mxu0 0.0
  %502 = vmatpush1.msra.mxu0 0.0
  %503 = vmatprep.subr.mxu0 0.0
  %504 = vmatpush1.msra.mxu0 0.0
  %505 = vmatprep.subr.mxu0 0.0
  %506 = vmatpush1.msra.mxu0 0.0
  %507 = vmatprep.subr.mxu0 0.0
  %508 = vmatpush1.msra.mxu0 0.0
  %509 = vmatprep.subr.mxu0 0.0
  %510 = vmatpush1.msra.mxu0 0.0
  %511 = vmatprep.subr.mxu0 0.0
  %512 = vmatpush1.msra.mxu0 0.0
  %513 = vmatprep.subr.mxu0 0.0
  %514 = vmatpush1.msra.mxu0 0.0
  %515 = vmatprep.subr.mxu0 0.0
  %516 = vmatpush1.msra.mxu0 0.0
  %517 = vmatprep.subr.mxu0 0.0
  %518 = vmatpush1.msra.mxu0 0.0
  %519 = vmatprep.subr.mxu0 0.0
  %520 = vmatpush1.msra.mxu0 0.0
  %521 = vmatprep.subr.mxu0 0.0
  %522 = vmatpush1.msra.mxu0 0.0
  %523 = vmatprep.subr.mxu0 0.0
  %524 = vmatpush1.msra.mxu0 0.0
  %525 = vmatprep.subr.mxu0 0.0
  %526 = vmatpush1.msra.mxu0 0.0
  %527 = vmatprep.subr.mxu0 0.0
  %528 = vmatpush1.msra.mxu0 0.0
  %529 = vmatprep.subr.mxu0 0.0
  %530 = vmatpush1.msra.mxu0 0.0
  %531 = vmatprep.subr.mxu0 0.0
  %532 = vmatpush1.msra.mxu0 0.0
  %533 = vmatprep.subr.mxu0 0.0
  %534 = vmatpush1.msra.mxu0 0.0
  %535 = vmatprep.subr.mxu0 0.0
  %536 = vmatpush1.msra.mxu0 0.0
  %537 = vmatprep.subr.mxu0 0.0
  %538 = vmatpush1.msra.mxu0 0.0
  %539 = vmatprep.subr.mxu0 0.0
  %540 = vmatpush1.msra.mxu0 0.0
  %541 = vmatprep.mubr.f32.mxu0 0.0
  %542 = vmatmul.mubr.f32.gmra.mrb[0].mxu0 %v466
  %v543 = vpop.f32.mrb[0].mxu0
  %v544 = vadd.f32 %v447, %v543
  %v545 = vpop.f32.mrb[0].mxu0
  %546 = vmatprep.mubr.f32.mxu0 0.0
  %547 = vmatmul.mubr.f32.gmra.mrb[0].mxu0 %v469
  %v548 = vpop.f32.mrb[0].mxu0
  %v549 = vadd.f32 %v452, %v548
  %v550 = vpop.f32.mrb[0].mxu0
  %551 = vmatprep.mubr.f32.mxu0 0.0
  %552 = vmatmul.mubr.f32.gmra.mrb[0].mxu0 %v472
  %v553 = vpop.f32.mrb[0].mxu0
  %v554 = vadd.f32 %v457, %v553
  %v555 = vpop.f32.mrb[0].mxu0
  %556 = vmatprep.mubr.f32.mxu0 0.0
  %557 = vmatmul.mubr.f32.gmra.mrb[0].mxu0 %v475
  %v558 = vpop.f32.mrb[0].mxu0
  %v559 = vadd.f32 %v462, %v558
  %v560 = vpop.f32.mrb[0].mxu0
  %561 = vdwg.mxu0
  %v562 = vld [vmem:[#allocation2 + $0x2] sm:$0xff]
  %v563 = vld [vmem:[#allocation2 + $0xa] sm:$0xff]
  %v564 = vld [vmem:[#allocation2 + $0x1a] sm:$0xff]
  %v565 = vld [vmem:[#allocation2 + $0x22] sm:$0xff]
  %s566 = scalar_lea.vmem %s3, 16
  %v567 = vld [vmem:[%s566] sm:$0xff]
  %v569 = vsel %vm31, %v562, 0
  %v572 = vsel %vm31, %v563, 0
  %v575 = vsel %vm31, %v564, 0
  %v578 = vsel %vm31, %v565, 0
  %580 = vmatprep.subr.mxu0 0.0
  %581 = vmatpush1.msra.mxu0 %v567
  %582 = vmatprep.subr.mxu0 0.0
  %583 = vmatpush1.msra.mxu0 0.0
  %584 = vmatprep.subr.mxu0 0.0
  %585 = vmatpush1.msra.mxu0 0.0
  %586 = vmatprep.subr.mxu0 0.0
  %587 = vmatpush1.msra.mxu0 0.0
  %588 = vmatprep.subr.mxu0 0.0
  %589 = vmatpush1.msra.mxu0 0.0
  %590 = vmatprep.subr.mxu0 0.0
  %591 = vmatpush1.msra.mxu0 0.0
  %592 = vmatprep.subr.mxu0 0.0
  %593 = vmatpush1.msra.mxu0 0.0
  %594 = vmatprep.subr.mxu0 0.0
  %595 = vmatpush1.msra.mxu0 0.0
  %596 = vmatprep.subr.mxu0 0.0
  %597 = vmatpush1.msra.mxu0 0.0
  %598 = vmatprep.subr.mxu0 0.0
  %599 = vmatpush1.msra.mxu0 0.0
  %600 = vmatprep.subr.mxu0 0.0
  %601 = vmatpush1.msra.mxu0 0.0
  %602 = vmatprep.subr.mxu0 0.0
  %603 = vmatpush1.msra.mxu0 0.0
  %604 = vmatprep.subr.mxu0 0.0
  %605 = vmatpush1.msra.mxu0 0.0
  %606 = vmatprep.subr.mxu0 0.0
  %607 = vmatpush1.msra.mxu0 0.0
  %608 = vmatprep.subr.mxu0 0.0
  %609 = vmatpush1.msra.mxu0 0.0
  %610 = vmatprep.subr.mxu0 0.0
  %611 = vmatpush1.msra.mxu0 0.0
  %612 = vmatprep.subr.mxu0 0.0
  %613 = vmatpush1.msra.mxu0 0.0
  %614 = vmatprep.subr.mxu0 0.0
  %615 = vmatpush1.msra.mxu0 0.0
  %616 = vmatprep.subr.mxu0 0.0
  %617 = vmatpush1.msra.mxu0 0.0
  %618 = vmatprep.subr.mxu0 0.0
  %619 = vmatpush1.msra.mxu0 0.0
  %620 = vmatprep.subr.mxu0 0.0
  %621 = vmatpush1.msra.mxu0 0.0
  %622 = vmatprep.subr.mxu0 0.0
  %623 = vmatpush1.msra.mxu0 0.0
  %624 = vmatprep.subr.mxu0 0.0
  %625 = vmatpush1.msra.mxu0 0.0
  %626 = vmatprep.subr.mxu0 0.0
  %627 = vmatpush1.msra.mxu0 0.0
  %628 = vmatprep.subr.mxu0 0.0
  %629 = vmatpush1.msra.mxu0 0.0
  %630 = vmatprep.subr.mxu0 0.0
  %631 = vmatpush1.msra.mxu0 0.0
  %632 = vmatprep.subr.mxu0 0.0
  %633 = vmatpush1.msra.mxu0 0.0
  %634 = vmatprep.subr.mxu0 0.0
  %635 = vmatpush1.msra.mxu0 0.0
  %636 = vmatprep.subr.mxu0 0.0
  %637 = vmatpush1.msra.mxu0 0.0
  %638 = vmatprep.subr.mxu0 0.0
  %639 = vmatpush1.msra.mxu0 0.0
  %640 = vmatprep.subr.mxu0 0.0
  %641 = vmatpush1.msra.mxu0 0.0
  %642 = vmatprep.subr.mxu0 0.0
  %643 = vmatpush1.msra.mxu0 0.0
  %644 = vmatprep.mubr.f32.mxu0 0.0
  %645 = vmatmul.mubr.f32.gmra.mrb[0].mxu0 %v569
  %v646 = vpop.f32.mrb[0].mxu0
  %v647 = vadd.f32 0.0, %v646
  %v648 = vpop.f32.mrb[0].mxu0
  %649 = vmatprep.mubr.f32.mxu0 0.0
  %650 = vmatmul.mubr.f32.gmra.mrb[0].mxu0 %v572
  %v651 = vpop.f32.mrb[0].mxu0
  %v652 = vadd.f32 0.0, %v651
  %v653 = vpop.f32.mrb[0].mxu0
  %654 = vmatprep.mubr.f32.mxu0 0.0
  %655 = vmatmul.mubr.f32.gmra.mrb[0].mxu0 %v575
  %v656 = vpop.f32.mrb[0].mxu0
  %v657 = vadd.f32 0.0, %v656
  %v658 = vpop.f32.mrb[0].mxu0
  %659 = vmatprep.mubr.f32.mxu0 0.0
  %660 = vmatmul.mubr.f32.gmra.mrb[0].mxu0 %v578
  %v661 = vpop.f32.mrb[0].mxu0
  %v662 = vadd.f32 0.0, %v661
  %v663 = vpop.f32.mrb[0].mxu0
  %664 = vdwg.mxu0
  %v665 = vadd.f32 %v544, %v647
  %v666 = vadd.f32 %v549, %v652
  %v667 = vadd.f32 %v554, %v657
  %v668 = vadd.f32 %v559, %v662
  %v669 = vld [vmem:[%s4] sm:$0x1]
  %v671 = vlaneseq
  %v672 = vshrl.u32 %v671, 7
  %v673 = vsub.s32 0, %v672
  %v674 = vrot.slane %v669, %v673
  %v676 = vadd.f32 %v665, %v674
  %v677 = vadd.f32 %v666, %v674
  %v678 = vadd.f32 %v667, %v674
  %v679 = vadd.f32 %v668, %v674
  %v680 = vld [vmem:[%s0 + $0x1] sm:$0xff]
  %v681 = vld [vmem:[%s0 + $0x9] sm:$0xff]
  %v682 = vld [vmem:[%s0 + $0x19] sm:$0xff]
  %v683 = vld [vmem:[%s0 + $0x21] sm:$0xff]
  %v684 = vadd.f32 %v676, %v680
  %v685 = vadd.f32 %v677, %v681
  %v686 = vadd.f32 %v678, %v682
  %v687 = vadd.f32 %v679, %v683
  %v688 = vmax.f32 %v684, 0.0
  %v689 = vmax.f32 %v685, 0.0
  %v690 = vmax.f32 %v686, 0.0
  %v691 = vmax.f32 %v687, 0.0
  %692 = vst.msk [vmem:[%s5] sm:$0xff] %vm31, %v688
  %693 = vst.msk [vmem:[%s5 + $0x8] sm:$0xff] %vm31, %v689
  %694 = vst.msk [vmem:[%s5 + $0x10] sm:$0xff] %vm31, %v690
  %695 = vst.msk [vmem:[%s5 + $0x18] sm:$0xff] %vm31, %v691
  // Predicated region
  $region22: #{tpu_custom_call.1} parent=0 // pred_check
    _
  $region23: #{tpu_custom_call.1} parent=0 // pred_check_branch
    %697 = sbr.rel (0) target = $region25
  $region24: #{tpu_custom_call.1} parent=0 // pred_region
    _
  $region25: #{tpu_custom_call.1} parent=0 // pred_fallthru
    _
  // Predicated region
  $region26: #{tpu_custom_call.1} parent=0 // pred_check
    _
  $region27: #{tpu_custom_call.1} parent=0 // pred_check_branch
    %699 = sbr.rel (0) target = $region29
  $region28: #{tpu_custom_call.1} parent=0 // pred_region
    _
  $region29: #{tpu_custom_call.1} parent=0 // pred_fallthru
    _

</llo_original>
